<compile_context>
chip_gen: v5e
topology: v5e:2x2
jax: 0.10.0
libtpu: 0.0.40
codegen_flags: <defaults>
</compile_context>

<pallas_src>
import functools

import jax
import jax.numpy as jnp
from jax.experimental import pallas as pl
from jax.experimental.pallas import tpu as pltpu

LANE = 128     # TPU lane width (last-dim tiling unit)
SUBLANE = 8    # TPU sublane width (second-to-last-dim tiling unit)


def _round_up(n, m):
    return ((n + m - 1) // m) * m


def _pad_to(arr, shape):
    pads = [(0, t - s) for s, t in zip(arr.shape, shape)]
    return jnp.pad(arr, pads)


def dqn_kernel(x_ref, w1_ref, b1_ref, w2_ref, b2_ref, w3_ref, b3_ref, out_ref):
    mm_dtype = w1_ref.dtype              # matmul operand dtype (f32 or bf16)
    # Hoist bias loads (f32, shape (1, N)).
    b1 = b1_ref[...]
    b2 = b2_ref[...]
    b3 = b3_ref[...]

    x = x_ref[...].astype(mm_dtype)      # no-op when x already matches mm_dtype
    # layer 1: Linear + ReLU (MXU matmul, f32 accumulate; cast fused in epilogue)
    h1 = jnp.dot(x, w1_ref[...], preferred_element_type=jnp.float32) + b1
    h1 = jnp.maximum(h1, 0.0).astype(mm_dtype)
    # layer 2: Linear + ReLU
    h2 = jnp.dot(h1, w2_ref[...], preferred_element_type=jnp.float32) + b2
    h2 = jnp.maximum(h2, 0.0).astype(mm_dtype)
    # layer 3: Linear (no activation); narrow (tb, outputs) store
    out = jnp.dot(h2, w3_ref[...], preferred_element_type=jnp.float32) + b3
    out_ref[...] = out.astype(out_ref.dtype)


def prepare_params(params, matmul_dtype=jnp.float32):
    """Pad only the hidden dim to 128 lanes; cast weights to the matmul dtype.

    The padding is exact: padded hidden units have zero weight and zero bias
    (ReLU(0)=0) and their rows in w2/w3 are zero.  x's feature dim and the
    output dim are left unpadded so no extra HBM bytes are streamed or sliced.
    """
    w1, b1, w2, b2, w3, b3 = (params[k] for k in ("w1", "b1", "w2", "b2", "w3", "b3"))
    n_states, hid = w1.shape
    outputs = w3.shape[1]
    hp = _round_up(hid, LANE)
    return {
        "w1": _pad_to(w1, (n_states, hp)).astype(matmul_dtype),
        "b1": _pad_to(b1, (1, hp)).astype(jnp.float32),
        "w2": _pad_to(w2, (hp, hp)).astype(matmul_dtype),
        "b2": _pad_to(b2, (1, hp)).astype(jnp.float32),
        "w3": _pad_to(w3, (hp, outputs)).astype(matmul_dtype),
        "b3": b3.astype(jnp.float32),
    }


@functools.partial(jax.jit, static_argnames=("tb",))
def dqn_forward(x, pp, *, tb=1024):
    """x: [B, n_states] (f32 or bf16); pp: prepare_params output. -> [B, outputs] f32."""
    B, n_states = x.shape
    hp = pp["w2"].shape[0]
    outputs = pp["w3"].shape[1]

    # Batch tile: large to amortize the ~0.35us per-grid-step overhead, multiple
    # of 8, and clamped so mid-sized B still yields >= 2 grid steps (so the
    # "parallel" batch axis can shard across both v7x TensorCores).
    tb = _round_up(max(int(tb), SUBLANE), SUBLANE)
    tb = min(tb, _round_up(pl.cdiv(B, 2), SUBLANE))
    grid = (pl.cdiv(B, tb),)

    # Raise scoped VMEM above the v5e 16 MiB default only when a big tb needs it
    # (double-buffered x/out blocks + resident weights + h1/h2 temporaries).
    x_bytes = jnp.dtype(x.dtype).itemsize
    w_bytes = jnp.dtype(pp["w1"].dtype).itemsize
    est = (2 * tb * n_states * x_bytes                                 # x double-buffer
           + 2 * tb * outputs * 4                                      # out double-buffer
           + 2 * (n_states * hp + hp * hp + hp * outputs) * w_bytes    # weights
           + 2 * (2 * hp + outputs) * 4                                # biases
           + 4 * tb * hp * 4)                                          # h1/h2 + cast temps
    vmem_limit = min(int(1.5 * est), 96 * 1024 * 1024) if est > 12 * 1024 * 1024 else None

    res = lambda shape: pl.BlockSpec(shape, lambda i: (0, 0))  # VMEM-resident across grid
    return pl.pallas_call(
        dqn_kernel,
        out_shape=jax.ShapeDtypeStruct((B, outputs), jnp.float32),
        grid=grid,
        in_specs=[
            pl.BlockSpec((tb, n_states), lambda i: (i, 0)),   # x: tiled over batch, unpadded K
            res(pp["w1"].shape),
            res(pp["b1"].shape),
            res(pp["w2"].shape),
            res(pp["b2"].shape),
            res(pp["w3"].shape),
            res(pp["b3"].shape),
        ],
        out_specs=pl.BlockSpec((tb, outputs), lambda i: (i, 0)),   # narrow, unpadded store
        compiler_params=pltpu.CompilerParams(
            dimension_semantics=("parallel",),
            vmem_limit_bytes=vmem_limit,
        ),
    )(x, pp["w1"], pp["b1"], pp["w2"], pp["b2"], pp["w3"], pp["b3"])


@jax.jit
def _dqn_xla(x, pp):
    """Plain-XLA path (same math) for tiny batches."""
    mm = pp["w1"].dtype
    h1 = jnp.maximum(jnp.dot(x.astype(mm), pp["w1"],
                             preferred_element_type=jnp.float32) + pp["b1"], 0.0)
    h2 = jnp.maximum(jnp.dot(h1.astype(mm), pp["w2"],
                             preferred_element_type=jnp.float32) + pp["b2"], 0.0)
    return jnp.dot(h2.astype(mm), pp["w3"],
                   preferred_element_type=jnp.float32) + pp["b3"]


def dqn_apply(x, pp, *, tb=1024, min_pallas_rows=512):
    """Dispatch: below ~512 rows the pallas_call launch overhead dominates."""
    if x.shape[0] < min_pallas_rows:
        return _dqn_xla(x, pp)
    return dqn_forward(x, pp, tb=tb)


def init_params(key, n_states, outputs, hid_dim):
    """Deterministic synthetic init (PyTorch-like uniform fan-in scaling)."""
    ks = jax.random.split(key, 6)

    def lin(kw, kb, fan_in, fan_out):
        bound = 1.0 / jnp.sqrt(fan_in)
        w = jax.random.uniform(kw, (fan_in, fan_out), jnp.float32, -bound, bound)
        b = jax.random.uniform(kb, (1, fan_out), jnp.float32, -bound, bound)
        return w, b

    w1, b1 = lin(ks[0], ks[1], n_states, hid_dim)
    w2, b2 = lin(ks[2], ks[3], hid_dim, hid_dim)
    w3, b3 = lin(ks[4], ks[5], hid_dim, outputs)
    return {"w1": w1, "b1": b1, "w2": w2, "b2": b2, "w3": w3, "b3": b3}


def dqn_reference(x, p):
    h1 = jnp.maximum(x @ p["w1"] + p["b1"], 0.0)
    h2 = jnp.maximum(h1 @ p["w2"] + p["b2"], 0.0)
    return h2 @ p["w3"] + p["b3"]


if __name__ == "__main__":
    # Small shapes consistent with the module: batch=8, n_states=16, hid_dim=32, outputs=4
    batch, n_states, hid_dim, outputs = 8, 16, 32, 4
    key = jax.random.PRNGKey(0)
    kx, kp, kx2 = jax.random.split(key, 3)
    x = jax.random.normal(kx, (batch, n_states), jnp.float32)
    params = init_params(kp, n_states, outputs, hid_dim)
    ref = dqn_reference(x, params)

    # f32-operand path.  Tolerance allows for the TPU default matmul precision
    # (f32 dots may use bf16 passes differently in XLA vs Mosaic).
    pp_f32 = prepare_params(params, matmul_dtype=jnp.float32)
    out = jax.block_until_ready(dqn_forward(x, pp_f32))
    assert out.shape == (batch, outputs)
    assert jnp.allclose(out, ref, atol=2e-2, rtol=2e-2)

    # bf16-operand path: x is cast upstream so the kernel streams bf16 from HBM;
    # MXU accumulation and bias/ReLU epilogue stay f32.
    pp_bf16 = prepare_params(params, matmul_dtype=jnp.bfloat16)
    out_bf16 = jax.block_until_ready(dqn_forward(x.astype(jnp.bfloat16), pp_bf16))
    assert jnp.allclose(out_bf16, ref, atol=5e-2, rtol=5e-2)

    # Larger, non-tile-aligned batch: exercises the partial boundary block and a
    # multi-step "parallel" grid (no wrapper pad/slice passes anymore).
    x_big = jax.random.normal(kx2, (300, n_states), jnp.float32)
    out_big = jax.block_until_ready(dqn_forward(x_big, pp_f32, tb=128))
    assert out_big.shape == (300, outputs)
    assert jnp.allclose(out_big, dqn_reference(x_big, params), atol=2e-2, rtol=2e-2)

    # Tiny-batch dispatch uses the plain-XLA fallback.
    out_small = jax.block_until_ready(dqn_apply(x, pp_f32))
    assert jnp.allclose(out_small, ref, atol=2e-2, rtol=2e-2)

    print("KERNEL_OK")
</pallas_src>

<mosaic_0001>
module attributes {stable_mosaic.version = 11 : i64} {
  func.func @dqn_kernel(%arg0: i32, %arg1: memref<8x16xf32, #tpu.memory_space<vmem>>, %arg2: memref<16x128xf32, #tpu.memory_space<vmem>>, %arg3: memref<1x128xf32, #tpu.memory_space<vmem>>, %arg4: memref<128x128xf32, #tpu.memory_space<vmem>>, %arg5: memref<1x128xf32, #tpu.memory_space<vmem>>, %arg6: memref<128x4xf32, #tpu.memory_space<vmem>>, %arg7: memref<1x4xf32, #tpu.memory_space<vmem>>, %arg8: memref<8x4xf32, #tpu.memory_space<vmem>>) attributes {dimension_semantics = [#tpu.dimension_semantics<parallel>], iteration_bounds = array<i64: 1>, scalar_prefetch = 0 : i64, scratch_operands = 0 : i64, tpu.core_type = #tpu.core_type<tc>, window_params = [{transform_indices = @transform_0, window_bounds = array<i64: 8, 16>}, {pipeline_mode = #tpu.pipeline_mode<synchronous>, transform_indices = @transform_1, window_bounds = array<i64: 16, 128>}, {pipeline_mode = #tpu.pipeline_mode<synchronous>, transform_indices = @transform_2, window_bounds = array<i64: 1, 128>}, {pipeline_mode = #tpu.pipeline_mode<synchronous>, transform_indices = @transform_3, window_bounds = array<i64: 128, 128>}, {pipeline_mode = #tpu.pipeline_mode<synchronous>, transform_indices = @transform_4, window_bounds = array<i64: 1, 128>}, {pipeline_mode = #tpu.pipeline_mode<synchronous>, transform_indices = @transform_5, window_bounds = array<i64: 128, 4>}, {pipeline_mode = #tpu.pipeline_mode<synchronous>, transform_indices = @transform_6, window_bounds = array<i64: 1, 4>}, {transform_indices = @transform_7, window_bounds = array<i64: 8, 4>}]} {
    %c0 = arith.constant 0 : index
    %c0_0 = arith.constant 0 : index
    %0 = vector.load %arg3[%c0, %c0_0] : memref<1x128xf32, #tpu.memory_space<vmem>>, vector<1x128xf32>
    %c0_1 = arith.constant 0 : index
    %c0_2 = arith.constant 0 : index
    %1 = vector.load %arg5[%c0_1, %c0_2] : memref<1x128xf32, #tpu.memory_space<vmem>>, vector<1x128xf32>
    %c0_3 = arith.constant 0 : index
    %c0_4 = arith.constant 0 : index
    %2 = vector.load %arg7[%c0_3, %c0_4] : memref<1x4xf32, #tpu.memory_space<vmem>>, vector<1x4xf32>
    %c0_5 = arith.constant 0 : index
    %c0_6 = arith.constant 0 : index
    %3 = vector.load %arg1[%c0_5, %c0_6] : memref<8x16xf32, #tpu.memory_space<vmem>>, vector<8x16xf32>
    %c0_7 = arith.constant 0 : index
    %c0_8 = arith.constant 0 : index
    %4 = vector.load %arg2[%c0_7, %c0_8] : memref<16x128xf32, #tpu.memory_space<vmem>>, vector<16x128xf32>
    %cst = arith.constant dense<0.000000e+00> : vector<8x128xf32>
    %5 = tpu.matmul %3, %4, %cst {dimension_numbers = #tpu.dot_dimension_numbers<[1], [0], [0], [1], [0, 0, 1, 1], [], []>} : vector<8x16xf32>, vector<16x128xf32>, vector<8x128xf32> -> vector<8x128xf32>
    %6 = vector.broadcast %0 : vector<1x128xf32> to vector<8x128xf32>
    %7 = arith.addf %5, %6 : vector<8x128xf32>
    %cst_9 = arith.constant 0.000000e+00 : f32
    %8 = vector.broadcast %cst_9 : f32 to vector<8x128xf32>
    %9 = arith.maximumf %7, %8 : vector<8x128xf32>
    %c0_10 = arith.constant 0 : index
    %c0_11 = arith.constant 0 : index
    %10 = vector.load %arg4[%c0_10, %c0_11] : memref<128x128xf32, #tpu.memory_space<vmem>>, vector<128x128xf32>
    %cst_12 = arith.constant dense<0.000000e+00> : vector<8x128xf32>
    %11 = tpu.matmul %9, %10, %cst_12 {dimension_numbers = #tpu.dot_dimension_numbers<[1], [0], [0], [1], [0, 0, 1, 1], [], []>} : vector<8x128xf32>, vector<128x128xf32>, vector<8x128xf32> -> vector<8x128xf32>
    %12 = vector.broadcast %1 : vector<1x128xf32> to vector<8x128xf32>
    %13 = arith.addf %11, %12 : vector<8x128xf32>
    %cst_13 = arith.constant 0.000000e+00 : f32
    %14 = vector.broadcast %cst_13 : f32 to vector<8x128xf32>
    %15 = arith.maximumf %13, %14 : vector<8x128xf32>
    %c0_14 = arith.constant 0 : index
    %c0_15 = arith.constant 0 : index
    %16 = vector.load %arg6[%c0_14, %c0_15] : memref<128x4xf32, #tpu.memory_space<vmem>>, vector<128x4xf32>
    %cst_16 = arith.constant dense<0.000000e+00> : vector<8x4xf32>
    %17 = tpu.matmul %15, %16, %cst_16 {dimension_numbers = #tpu.dot_dimension_numbers<[1], [0], [0], [1], [0, 0, 1, 1], [], []>} : vector<8x128xf32>, vector<128x4xf32>, vector<8x4xf32> -> vector<8x4xf32>
    %18 = vector.broadcast %2 : vector<1x4xf32> to vector<8x4xf32>
    %19 = arith.addf %17, %18 : vector<8x4xf32>
    %c0_17 = arith.constant 0 : index
    %c0_18 = arith.constant 0 : index
    %20 = vector.load %arg8[%c0_17, %c0_18] : memref<8x4xf32, #tpu.memory_space<vmem>>, vector<8x4xf32>
    tpu.vector_store %arg8[%c0_17, %c0_18], %19 {strides = array<i32>} : memref<8x4xf32, #tpu.memory_space<vmem>>, vector<8x4xf32>,
    return
  }
  func.func @transform_0(%arg0: i32) -> (i32, i32) {
    %c0_i32 = arith.constant 0 : i32
    %c0_i32_0 = arith.constant 0 : i32
    return %arg0, %c0_i32 : i32, i32
  }
  func.func @transform_1(%arg0: i32) -> (i32, i32) {
    %c0_i32 = arith.constant 0 : i32
    %c0_i32_0 = arith.constant 0 : i32
    %c0_i32_1 = arith.constant 0 : i32
    return %c0_i32, %c0_i32_0 : i32, i32
  }
  func.func @transform_2(%arg0: i32) -> (i32, i32) {
    %c0_i32 = arith.constant 0 : i32
    %c0_i32_0 = arith.constant 0 : i32
    %c0_i32_1 = arith.constant 0 : i32
    return %c0_i32, %c0_i32_0 : i32, i32
  }
  func.func @transform_3(%arg0: i32) -> (i32, i32) {
    %c0_i32 = arith.constant 0 : i32
    %c0_i32_0 = arith.constant 0 : i32
    %c0_i32_1 = arith.constant 0 : i32
    return %c0_i32, %c0_i32_0 : i32, i32
  }
  func.func @transform_4(%arg0: i32) -> (i32, i32) {
    %c0_i32 = arith.constant 0 : i32
    %c0_i32_0 = arith.constant 0 : i32
    %c0_i32_1 = arith.constant 0 : i32
    return %c0_i32, %c0_i32_0 : i32, i32
  }
  func.func @transform_5(%arg0: i32) -> (i32, i32) {
    %c0_i32 = arith.constant 0 : i32
    %c0_i32_0 = arith.constant 0 : i32
    %c0_i32_1 = arith.constant 0 : i32
    return %c0_i32, %c0_i32_0 : i32, i32
  }
  func.func @transform_6(%arg0: i32) -> (i32, i32) {
    %c0_i32 = arith.constant 0 : i32
    %c0_i32_0 = arith.constant 0 : i32
    %c0_i32_1 = arith.constant 0 : i32
    return %c0_i32, %c0_i32_0 : i32, i32
  }
  func.func @transform_7(%arg0: i32) -> (i32, i32) {
    %c0_i32 = arith.constant 0 : i32
    %c0_i32_0 = arith.constant 0 : i32
    return %arg0, %c0_i32 : i32, i32
  }
}

</mosaic_0001>

<llo_original>
// kernel: dqn_forward.1
$region0: #{dqn_forward.1}
  #allocation0 [shape = 'u32[]', space=smem, size = 0x4, offset = 0x4, fixed_abs, tag = 'smem constant byte address 0x4 - core index']
  #allocation1 [shape = 'u32[72,128]{1,0:T(1,128)}', space=vmem, size = 0x9000, scoped, tag = 'internal scratch']
  %s0 = inlined_call_operand.hbm [shape: f32[8,16], index: 0, kind: input, shape index: {}]
  %s1 = inlined_call_operand.hbm [shape: f32[16,128], index: 1, kind: input, shape index: {}]
  %s2 = inlined_call_operand.vmem [shape: f32[1,128], index: 2, kind: input, shape index: {}]
  %s3 = inlined_call_operand.vmem [shape: f32[128,128], index: 3, kind: input, shape index: {}]
  %s4 = inlined_call_operand.vmem [shape: f32[1,128], index: 4, kind: input, shape index: {}]
  %s5 = inlined_call_operand.vmem [shape: f32[128,4], index: 5, kind: input, shape index: {}]
  %s6 = inlined_call_operand.vmem [shape: f32[1,4], index: 6, kind: input, shape index: {}]
  %s7 = inlined_call_operand.vmem [shape: f32[8,4], index: 7, kind: output, shape index: {}]
  %s8 = sld [smem:[#allocation0]]
  $region46: #{dqn_forward.1} parent=0
    _
  %s10 = ssub.s32 1, %s8
  %s11 = scalar_select 0, %s10, %s8
  $region1: #{dqn_forward.1} parent=0
    #allocation2 [shape = 'u8[4096]{0}', space=vmem, size = 0x1000, scoped, tag = 'input window, operand 0, single buffered']
    #allocation3 [shape = 's32[1]{0}', space=sflag, size = 0x4, scoped, tag = 'scoped memory for dqn_forward.1']
    #allocation4 [shape = 'u8[8192]{0}', space=vmem, size = 0x2000, scoped, tag = 'input window, operand 1, single buffered']
    #allocation5 [shape = 's32[1]{0}', space=sflag, size = 0x4, scoped, tag = 'scoped memory for dqn_forward.1']
    %12 = vsyncpa [#allocation3], 0
    %13 = vsyncpa [#allocation5], 0
    // Predicated region
    $region2: #{dqn_forward.1} parent=1 // pred_check
      _
    $region3: #{dqn_forward.1} parent=1 // pred_check_branch
      %15 = sbr.rel (0) target = $region5
    $region4: #{dqn_forward.1} parent=1 // pred_region
      %17 = vsyncadd [#allocation3], 0
      %s19 = sshll.u32 %s0, 4
      %s20 = int_to_ptr.hbm [resolvable:$true] %s19
      %s21 = sshll.u32 [#allocation2], 4
      %s22 = int_to_ptr.vmem [resolvable:$true] %s21
      %24 = dma.hbm_to_vmem [thread:$0]  %s20, 128, %s22, [#allocation3]
    $region5: #{dqn_forward.1} parent=1 // pred_fallthru
      _
    // Predicated region
    $region6: #{dqn_forward.1} parent=1 // pred_check
      _
    $region7: #{dqn_forward.1} parent=1 // pred_check_branch
      %26 = sbr.rel (0) target = $region9
    $region8: #{dqn_forward.1} parent=1 // pred_region
      %28 = vsyncadd [#allocation5], 0
      %s29 = sshll.u32 %s1, 4
      %s30 = int_to_ptr.hbm [resolvable:$true] %s29
      %s31 = sshll.u32 [#allocation4], 4
      %s32 = int_to_ptr.vmem [resolvable:$true] %s31
      %37 = dma.hbm_to_vmem [thread:$0]  %s30, 256, %s32, [#allocation5], 128, 128, 8
    $region9: #{dqn_forward.1} parent=1 // pred_fallthru
      _
    // Predicated region
    $region10: #{dqn_forward.1} parent=1 // pred_check
      _
    $region11: #{dqn_forward.1} parent=1 // pred_check_branch
      %39 = sbr.rel (0) target = $region13
    $region12: #{dqn_forward.1} parent=1 // pred_region
      _
    $region13: #{dqn_forward.1} parent=1 // pred_fallthru
      _
    // Predicated region
    $region14: #{dqn_forward.1} parent=1 // pred_check
      _
    $region15: #{dqn_forward.1} parent=1 // pred_check_branch
      %41 = sbr.rel (0) target = $region17
    $region16: #{dqn_forward.1} parent=1 // pred_region
      _
    $region17: #{dqn_forward.1} parent=1 // pred_fallthru
      _
    // Predicated region
    $region18: #{dqn_forward.1} parent=1 // pred_check
      _
    $region19: #{dqn_forward.1} parent=1 // pred_check_branch
      %43 = sbr.rel (0) target = $region21
    $region20: #{dqn_forward.1} parent=1 // pred_region
      _
    $region21: #{dqn_forward.1} parent=1 // pred_fallthru
      _
    // Predicated region
    $region22: #{dqn_forward.1} parent=1 // pred_check
      _
    $region23: #{dqn_forward.1} parent=1 // pred_check_branch
      %45 = sbr.rel (0) target = $region25
    $region24: #{dqn_forward.1} parent=1 // pred_region
      _
    $region25: #{dqn_forward.1} parent=1 // pred_fallthru
      _
    // Predicated region
    $region26: #{dqn_forward.1} parent=1 // pred_check
      _
    $region27: #{dqn_forward.1} parent=1 // pred_check_branch
      %47 = sbr.rel (0) target = $region29
    $region28: #{dqn_forward.1} parent=1 // pred_region
      _
    $region29: #{dqn_forward.1} parent=1 // pred_fallthru
      _
    // Predicated region
    $region30: #{dqn_forward.1} parent=1 // pred_check
      _
    $region31: #{dqn_forward.1} parent=1 // pred_check_branch
      %49 = sbr.rel (0) target = $region33
    $region32: #{dqn_forward.1} parent=1 // pred_region
      %51 = dma.done [#allocation3], 128
    $region33: #{dqn_forward.1} parent=1 // pred_fallthru
      _
    // Predicated region
    $region34: #{dqn_forward.1} parent=1 // pred_check
      _
    $region35: #{dqn_forward.1} parent=1 // pred_check_branch
      %53 = sbr.rel (0) target = $region37
    $region36: #{dqn_forward.1} parent=1 // pred_region
      %55 = dma.done [#allocation5], 256
    $region37: #{dqn_forward.1} parent=1 // pred_fallthru
      _
    %v56 = vld [vmem:[%s2] sm:$0x1]
    %v57 = vld [vmem:[%s4] sm:$0x1]
    %v58 = vld [vmem:[%s6] sm:$0x1]
    %v59 = vld [vmem:[#allocation2] sm:$0xff]
    %v60 = vld [vmem:[#allocation4] sm:$0xff]
    %v61 = vld [vmem:[#allocation4 + $0x8] sm:$0xff]
    %v63 = vperm.slane %v56, 0
    %vm65 = vcmask 130048
    %v67 = vsel %vm65, %v59, 0
    %69 = vmatpush.msra.mxu0 0.0
    %70 = vmatpush.msra.mxu0 0.0
    %71 = vmatpush.msra.mxu0 0.0
    %72 = vmatpush.msra.mxu0 0.0
    %73 = vmatpush.msra.mxu0 0.0
    %74 = vmatpush.msra.mxu0 0.0
    %75 = vmatpush.msra.mxu0 0.0
    %76 = vmatpush.msra.mxu0 0.0
    %77 = vmatpush.msra.mxu0 0.0
    %78 = vmatpush.msra.mxu0 0.0
    %79 = vmatpush.msra.mxu0 0.0
    %80 = vmatpush.msra.mxu0 0.0
    %81 = vmatpush.msra.mxu0 0.0
    %82 = vmatpush.msra.mxu0 0.0
    %83 = vmatpush.msra.mxu0 %v61
    %84 = vmatpush.msra.mxu0 %v60
    %85 = vmatmul.f32.gmra.mxu0 %v67
    %v86 = vpop.f32.mrf.mxu0
    %v87 = vadd.f32 %v63, %v86
    %88 = vdwg.mxu0
    %v89 = vmax.f32 %v87, 0.0
    %v90 = vld [vmem:[%s3] sm:$0xff]
    %v91 = vld [vmem:[%s3 + $0x8] sm:$0xff]
    %v92 = vld [vmem:[%s3 + $0x10] sm:$0xff]
    %v93 = vld [vmem:[%s3 + $0x18] sm:$0xff]
    %v94 = vld [vmem:[%s3 + $0x20] sm:$0xff]
    %v95 = vld [vmem:[%s3 + $0x28] sm:$0xff]
    %v96 = vld [vmem:[%s3 + $0x30] sm:$0xff]
    %v97 = vld [vmem:[%s3 + $0x38] sm:$0xff]
    %v98 = vld [vmem:[%s3 + $0x40] sm:$0xff]
    %v99 = vld [vmem:[%s3 + $0x48] sm:$0xff]
    %v100 = vld [vmem:[%s3 + $0x50] sm:$0xff]
    %v101 = vld [vmem:[%s3 + $0x58] sm:$0xff]
    %v102 = vld [vmem:[%s3 + $0x60] sm:$0xff]
    %v103 = vld [vmem:[%s3 + $0x68] sm:$0xff]
    %v104 = vld [vmem:[%s3 + $0x70] sm:$0xff]
    %v105 = vld [vmem:[%s3 + $0x78] sm:$0xff]
    %v107 = vperm.slane %v57, 0
    %109 = vmatpush.msra.mxu0 %v105
    %110 = vmatpush.msra.mxu0 %v104
    %111 = vmatpush.msra.mxu0 %v103
    %112 = vmatpush.msra.mxu0 %v102
    %113 = vmatpush.msra.mxu0 %v101
    %114 = vmatpush.msra.mxu0 %v100
    %115 = vmatpush.msra.mxu0 %v99
    %116 = vmatpush.msra.mxu0 %v98
    %117 = vmatpush.msra.mxu0 %v97
    %118 = vmatpush.msra.mxu0 %v96
    %119 = vmatpush.msra.mxu0 %v95
    %120 = vmatpush.msra.mxu0 %v94
    %121 = vmatpush.msra.mxu0 %v93
    %122 = vmatpush.msra.mxu0 %v92
    %123 = vmatpush.msra.mxu0 %v91
    %124 = vmatpush.msra.mxu0 %v90
    %125 = vmatmul.f32.gmra.mxu0 %v89
    %v126 = vpop.f32.mrf.mxu0
    %v127 = vadd.f32 %v107, %v126
    %128 = vdwg.mxu0
    %v129 = vmax.f32 %v127, 0.0
    %v130 = vld [vmem:[%s5] sm:$0xff]
    %v131 = vld [vmem:[%s5 + $0x8] sm:$0xff]
    %v132 = vld [vmem:[%s5 + $0x10] sm:$0xff]
    %v133 = vld [vmem:[%s5 + $0x18] sm:$0xff]
    %v134 = vld [vmem:[%s5 + $0x20] sm:$0xff]
    %v135 = vld [vmem:[%s5 + $0x28] sm:$0xff]
    %v136 = vld [vmem:[%s5 + $0x30] sm:$0xff]
    %v137 = vld [vmem:[%s5 + $0x38] sm:$0xff]
    %v138 = vld [vmem:[%s5 + $0x40] sm:$0xff]
    %v139 = vld [vmem:[%s5 + $0x48] sm:$0xff]
    %v140 = vld [vmem:[%s5 + $0x50] sm:$0xff]
    %v141 = vld [vmem:[%s5 + $0x58] sm:$0xff]
    %v142 = vld [vmem:[%s5 + $0x60] sm:$0xff]
    %v143 = vld [vmem:[%s5 + $0x68] sm:$0xff]
    %v144 = vld [vmem:[%s5 + $0x70] sm:$0xff]
    %v145 = vld [vmem:[%s5 + $0x78] sm:$0xff]
    %v147 = vperm.slane %v58, 0
    %149 = vmatpush.msra.mxu0 %v145
    %150 = vmatpush.msra.mxu0 %v144
    %151 = vmatpush.msra.mxu0 %v143
    %152 = vmatpush.msra.mxu0 %v142
    %153 = vmatpush.msra.mxu0 %v141
    %154 = vmatpush.msra.mxu0 %v140
    %155 = vmatpush.msra.mxu0 %v139
    %156 = vmatpush.msra.mxu0 %v138
    %157 = vmatpush.msra.mxu0 %v137
    %158 = vmatpush.msra.mxu0 %v136
    %159 = vmatpush.msra.mxu0 %v135
    %160 = vmatpush.msra.mxu0 %v134
    %161 = vmatpush.msra.mxu0 %v133
    %162 = vmatpush.msra.mxu0 %v132
    %163 = vmatpush.msra.mxu0 %v131
    %164 = vmatpush.msra.mxu0 %v130
    %165 = vmatmul.f32.gmra.mxu0 %v129
    %v166 = vpop.f32.mrf.mxu0
    %v167 = vadd.f32 %v147, %v166
    %168 = vdwg.mxu0
    %vm169 = vcmask 31744
    %170 = vst.msk [vmem:[%s7] sm:$0xff] %vm169, %v167
    // Predicated region
    $region38: #{dqn_forward.1} parent=1 // pred_check
      _
    $region39: #{dqn_forward.1} parent=1 // pred_check_branch
      %172 = sbr.rel (0) target = $region41
    $region40: #{dqn_forward.1} parent=1 // pred_region
      _
    $region41: #{dqn_forward.1} parent=1 // pred_fallthru
      _
    // Predicated region
    $region42: #{dqn_forward.1} parent=1 // pred_check
      _
    $region43: #{dqn_forward.1} parent=1 // pred_check_branch
      %174 = sbr.rel (0) target = $region45
    $region44: #{dqn_forward.1} parent=1 // pred_region
      _
    $region45: #{dqn_forward.1} parent=1 // pred_fallthru
      _
    %175 = vsyncpa [#allocation3], 1
    %176 = vsyncpa [#allocation5], 1

</llo_original>
